<compile_context>
chip_gen: v5e
topology: v5e:2x2
jax: 0.10.0
libtpu: 0.0.40
codegen_flags: <defaults>
</compile_context>

<pallas_src>
import jax
import jax.numpy as jnp
from jax.experimental import pallas as pl
from jax.experimental.pallas import tpu as pltpu


def _round_up(x, m):
    return ((x + m - 1) // m) * m


def _vmem_budget_and_limit():
    """Generation-aware VMEM sizing (128 MiB physical on v5e/v6e, 64 MiB on v7x)."""
    try:
        cap = int(pltpu.get_tpu_info().vmem_capacity_bytes)
    except Exception:
        cap = 64 * 1024 * 1024            # conservative fallback (v7x per-core VMEM)
    cap = max(cap, 32 * 1024 * 1024)
    budget = max(16 << 20, min(int(0.70 * cap), cap - (12 << 20)))
    limit = max(budget + (4 << 20), min(int(0.85 * cap), cap - (4 << 20)))
    return budget, limit


def _pick_tile_b(batch, n, kpad, vmem_budget):
    """Largest batch tile whose per-step VMEM footprint (lane padding, double
    buffering, matmul temporaries, resident operands) fits the budget."""
    npad = _round_up(n, 128)
    per_row = 4 * (2 * npad          # X input, 2 pipeline buffers (lane-padded)
                   + 2 * 128         # (tile_b, 1) linear output, 2 buffers (lane-padded)
                   + npad            # x*x temporary
                   + 2 * kpad)       # zaug + zaug^2 temporaries
    fixed = 4 * (_round_up(n, 8) * kpad    # resident [w | V]
                 + 8 * npad                # resident ||v||^2 row
                 + 2 * 8 * 128)            # (1, 128) partial-sum output buffers
    tile = (vmem_budget - fixed) // per_row
    tile = min(tile, 16384)
    if tile >= 128:
        tile = (tile // 128) * 128
    return max(8, (int(tile) // 8) * 8)


def _resident_spec(block_shape, nbytes):
    """BlockSpec for a grid-invariant operand. Single-buffer it once it is big
    enough for the second pipeline buffer to matter (saves VMEM, esp. on v7x)."""
    zeros = (0,) * len(block_shape)
    if nbytes > (1 << 20):
        return pl.BlockSpec(block_shape, lambda i: zeros,
                            pipeline_mode=pl.Buffered(1))
    return pl.BlockSpec(block_shape, lambda i: zeros)


def _ffm_kernel(x_ref, vw_ref, sqn_ref, lin_ref, part_ref):
    x = x_ref[...]                                   # (TB, n)      f32
    vw = vw_ref[...]                                 # (n, KPAD)    f32, [w | V | 0-pad]

    # Single fused MXU pass: lane 0 is X @ w, lanes 1..k are Z = X @ V, rest zero.
    zaug = jnp.dot(x, vw, preferred_element_type=jnp.float32)     # (TB, KPAD)

    # Linear term straight from lane 0 (lane offset 0: no rotate needed).
    lin_ref[...] = zaug[:, :1]

    # --- FM identity, batch-summed ---
    # Sublane (axis-0) reductions only; lane reduction is deferred to the wrapper.
    zsq = jnp.sum(zaug * zaug, axis=0, keepdims=True)             # (1, KPAD)
    lane = jax.lax.broadcasted_iota(jnp.int32, zsq.shape, 1)
    zsq = jnp.where(lane == 0, 0.0, zsq)                          # drop the w column
                                                                  # (padded lanes are 0)
    kpad = zsq.shape[1]
    acc = zsq[:, 0:128]
    for c in range(1, kpad // 128):                               # static lane-aligned fold
        acc = acc + zsq[:, c * 128:(c + 1) * 128]

    # Diagonal term sum_b sum_i x_bi^2 ||v_i||^2: square, reduce over the batch,
    # then ONE tiny vector multiply with the precomputed norms and a single small
    # cross-lane reduce (on ceil(n/128) lanes, once per tile — not per row).
    colsum = jnp.sum(x * x, axis=0, keepdims=True)                # (1, n)
    diag = jnp.sum(colsum * sqn_ref[...])                         # scalar

    # Spread the scalar evenly over the 128 lanes so the wrapper's plain lane-sum
    # of the per-tile partials recovers 0.5 * (sum ||x V||^2 - diag) exactly.
    part_ref[...] = 0.5 * acc - (0.5 / 128.0) * diag


def ffm_forward(x, w, b, v_sel, *, tile_b=None):
    """x: (B, n) f32, w: (n, 1) f32, b: scalar, v_sel: (n, k) f32. Returns (B, 1)."""
    B, n = x.shape
    k = v_sel.shape[1]
    kpad = _round_up(k + 1, 128)

    vmem_budget, vmem_limit = _vmem_budget_and_limit()

    if tile_b is None:
        tile_b = _pick_tile_b(B, n, kpad, vmem_budget)
        # Keep >= ~4 grid steps when the batch allows it so a megacore part (v7x:
        # 2 TensorCores sharing the "parallel" grid) never idles a core; do not
        # shrink tiles below 512 rows for this.
        par_cap = max(512, _round_up(-(-B // 4), 8))
        tile_b = min(tile_b, par_cap)
    tile_b = max(8, (int(tile_b) // 8) * 8)
    tile_b = min(tile_b, _round_up(B, 8))

    # Pad the batch to a tile multiple; zero rows contribute nothing to the
    # interaction and their (bias-free) linear rows are sliced off below.
    Bp = _round_up(B, tile_b)
    x = x.astype(jnp.float32)
    if Bp != B:
        x = jnp.pad(x, ((0, Bp - B), (0, 0)))
    G = Bp // tile_b

    # Fused linear/factor matrix, zero-padded to a full 128-lane width:
    # lane 0 = w, lanes 1..k = V, remaining lanes = 0.
    vw = jnp.zeros((n, kpad), jnp.float32)
    vw = vw.at[:, 0].set(w[:, 0].astype(jnp.float32))
    vw = vw.at[:, 1:k + 1].set(v_sel.astype(jnp.float32))

    # Batch-invariant per-feature squared norms, precomputed once.
    sqn = jnp.sum(v_sel.astype(jnp.float32) ** 2, axis=1).reshape(1, n)

    lin, parts = pl.pallas_call(
        _ffm_kernel,
        out_shape=(
            jax.ShapeDtypeStruct((Bp, 1), jnp.float32),           # X @ w (bias added later)
            jax.ShapeDtypeStruct((1, G * 128), jnp.float32),      # per-tile partial sums
        ),
        grid=(G,),
        in_specs=(
            pl.BlockSpec((tile_b, n), lambda i: (i, 0)),          # X: streamed batch tiles
            _resident_spec((n, kpad), n * kpad * 4),              # [w | V]: resident
            _resident_spec((1, n), n * 4),                        # ||v_i||^2: resident
        ),
        out_specs=(
            # TODO(synk): a lane-dense (Bp//128, 128) linear-output layout would
            # avoid masked stores but needs a sublane->lane relayout in-kernel;
            # kept as the natural (tile_b, 1) block for lowering robustness.
            pl.BlockSpec((tile_b, 1), lambda i: (i, 0)),
            pl.BlockSpec((1, 128), lambda i: (0, i)),
        ),
        compiler_params=pltpu.CompilerParams(
            dimension_semantics=("parallel",),
            vmem_limit_bytes=int(vmem_limit),
        ),
        cost_estimate=pl.CostEstimate(
            flops=2 * Bp * n * kpad + 6 * Bp * n,
            transcendentals=0,
            bytes_accessed=4 * (Bp * n + n * kpad + n + Bp + G * 128),
        ),
    )(x, vw, sqn)

    inter = jnp.sum(parts)                                        # final lane reduction
    return lin[:B] + (inter + jnp.asarray(b, jnp.float32))


def ffm_reference(x, w, b, v_sel):
    """Plain-JAX mirror of the PyTorch double loop (for correctness check)."""
    n = x.shape[1]
    linear = x @ w + b
    inter = jnp.zeros(x.shape[0], jnp.float32)
    for i in range(n):
        for j in range(i + 1, n):
            wij = jnp.sum(v_sel[i] * v_sel[j])
            inter = inter + wij * x[:, i] * x[:, j]
    return linear + jnp.sum(inter)


if __name__ == "__main__":
    # Small, deterministic problem (B chosen to exercise batch padding + a >1-step grid).
    B, n, f_size, k = 10, 16, 4, 8
    key = jax.random.PRNGKey(0)
    kx, kw, kb, kv = jax.random.split(key, 4)

    x = jax.random.normal(kx, (B, n), jnp.float32)

    # nn.Linear(n, 1): weight (1, n) used here as (n, 1); bias ~ U(-1/sqrt(n), 1/sqrt(n)).
    bound = 1.0 / (n ** 0.5)
    w = jax.random.uniform(kw, (n, 1), jnp.float32, -bound, bound)
    b = jax.random.uniform(kb, (), jnp.float32, -bound, bound)

    # self.vector = randn(n, f_size, k); feature2field: feature i -> field i % f_size.
    vector = jax.random.normal(kv, (n, f_size, k), jnp.float32)
    feature2field = jnp.arange(n, dtype=jnp.int32) % f_size
    v_sel = vector[jnp.arange(n), feature2field]                  # (n, k) glue gather

    ref = ffm_reference(x, w, b, v_sel)

    out_auto = ffm_forward(x, w, b, v_sel)                        # auto tile sizing
    out_grid = ffm_forward(x, w, b, v_sel, tile_b=8)              # forced 2-step grid
    jax.block_until_ready((out_auto, out_grid))

    assert out_auto.shape == (B, 1) and out_grid.shape == (B, 1)
    assert jnp.allclose(out_auto, ref, rtol=1e-3, atol=1e-3), (out_auto, ref)
    assert jnp.allclose(out_grid, ref, rtol=1e-3, atol=1e-3), (out_grid, ref)

    # TODO(synk): train_batch (SGD + BCEWithLogitsLoss) is host-side training glue,
    # not part of the forward pass, and is not implemented as a kernel.
    print("KERNEL_OK")
</pallas_src>

<mosaic_0001>
module attributes {stable_mosaic.version = 11 : i64} {
  func.func @_ffm_kernel(%arg0: i32, %arg1: memref<16x16xf32, #tpu.memory_space<vmem>>, %arg2: memref<16x128xf32, #tpu.memory_space<vmem>>, %arg3: memref<1x16xf32, #tpu.memory_space<vmem>>, %arg4: memref<16x1xf32, #tpu.memory_space<vmem>>, %arg5: memref<1x128xf32, #tpu.memory_space<vmem>>) attributes {dimension_semantics = [#tpu.dimension_semantics<parallel>], iteration_bounds = array<i64: 1>, scalar_prefetch = 0 : i64, scratch_operands = 0 : i64, tpu.core_type = #tpu.core_type<tc>, window_params = [{transform_indices = @transform_0, window_bounds = array<i64: 16, 16>}, {pipeline_mode = #tpu.pipeline_mode<synchronous>, transform_indices = @transform_1, window_bounds = array<i64: 16, 128>}, {pipeline_mode = #tpu.pipeline_mode<synchronous>, transform_indices = @transform_2, window_bounds = array<i64: 1, 16>}, {transform_indices = @transform_3, window_bounds = array<i64: 16, 1>}, {transform_indices = @transform_4, window_bounds = array<i64: 1, 128>}]} {
    %c0 = arith.constant 0 : index
    %c0_0 = arith.constant 0 : index
    %0 = vector.load %arg1[%c0, %c0_0] : memref<16x16xf32, #tpu.memory_space<vmem>>, vector<16x16xf32>
    %c0_1 = arith.constant 0 : index
    %c0_2 = arith.constant 0 : index
    %1 = vector.load %arg2[%c0_1, %c0_2] : memref<16x128xf32, #tpu.memory_space<vmem>>, vector<16x128xf32>
    %cst = arith.constant dense<0.000000e+00> : vector<16x128xf32>
    %2 = tpu.matmul %0, %1, %cst {dimension_numbers = #tpu.dot_dimension_numbers<[1], [0], [0], [1], [0, 0, 1, 1], [], []>} : vector<16x16xf32>, vector<16x128xf32>, vector<16x128xf32> -> vector<16x128xf32>
    %3 = vector.extract_strided_slice %2 {offsets = [0, 0], sizes = [16, 1], strides = [1, 1]} : vector<16x128xf32> to vector<16x1xf32>
    %c0_3 = arith.constant 0 : index
    %c0_4 = arith.constant 0 : index
    %4 = vector.load %arg4[%c0_3, %c0_4] : memref<16x1xf32, #tpu.memory_space<vmem>>, vector<16x1xf32>
    tpu.vector_store %arg4[%c0_3, %c0_4], %3 {strides = array<i32>} : memref<16x1xf32, #tpu.memory_space<vmem>>, vector<16x1xf32>,
    %5 = arith.mulf %2, %2 : vector<16x128xf32>
    %cst_5 = arith.constant dense<0.000000e+00> : vector<128xf32>
    %6 = vector.multi_reduction <add>, %5, %cst_5 [0] : vector<16x128xf32> to vector<128xf32>
    %7 = vector.shape_cast %6 : vector<128xf32> to vector<1x128xf32>
    %8 = tpu.iota {dimensions = array<i32: 1>} : vector<1x128xi32>
    %c0_i32 = arith.constant 0 : i32
    %9 = vector.broadcast %c0_i32 : i32 to vector<1x128xi32>
    %10 = arith.cmpi eq, %8, %9 : vector<1x128xi32>
    %cst_6 = arith.constant 0.000000e+00 : f32
    %11 = vector.broadcast %cst_6 : f32 to vector<1x128xf32>
    %12 = arith.select %10, %11, %7 : vector<1x128xi1>, vector<1x128xf32>
    %13 = arith.mulf %0, %0 : vector<16x16xf32>
    %cst_7 = arith.constant dense<0.000000e+00> : vector<16xf32>
    %14 = vector.multi_reduction <add>, %13, %cst_7 [0] : vector<16x16xf32> to vector<16xf32>
    %15 = vector.shape_cast %14 : vector<16xf32> to vector<1x16xf32>
    %c0_8 = arith.constant 0 : index
    %c0_9 = arith.constant 0 : index
    %16 = vector.load %arg3[%c0_8, %c0_9] : memref<1x16xf32, #tpu.memory_space<vmem>>, vector<1x16xf32>
    %17 = arith.mulf %15, %16 : vector<1x16xf32>
    %18 = vector.shape_cast %17 : vector<1x16xf32> to vector<1x1x16xf32>
    %cst_10 = arith.constant dense<0.000000e+00> : vector<1xf32>
    %19 = vector.multi_reduction <add>, %18, %cst_10 [1, 2] : vector<1x1x16xf32> to vector<1xf32>
    %20 = vector.shape_cast %19 : vector<1xf32> to vector<1x1x1xf32>
    %21 = vector.extract %20[0, 0, 0] : f32 from vector<1x1x1xf32>
    %cst_11 = arith.constant 5.000000e-01 : f32
    %22 = vector.broadcast %cst_11 : f32 to vector<1x128xf32>
    %23 = arith.mulf %22, %12 : vector<1x128xf32>
    %cst_12 = arith.constant 3.906250e-03 : f32
    %24 = arith.mulf %cst_12, %21 : f32
    %25 = vector.broadcast %24 : f32 to vector<1x128xf32>
    %26 = arith.subf %23, %25 : vector<1x128xf32>
    %c0_13 = arith.constant 0 : index
    %c0_14 = arith.constant 0 : index
    %27 = vector.load %arg5[%c0_13, %c0_14] : memref<1x128xf32, #tpu.memory_space<vmem>>, vector<1x128xf32>
    tpu.vector_store %arg5[%c0_13, %c0_14], %26 {strides = array<i32>} : memref<1x128xf32, #tpu.memory_space<vmem>>, vector<1x128xf32>,
    return
  }
  func.func @transform_0(%arg0: i32) -> (i32, i32) {
    %c0_i32 = arith.constant 0 : i32
    %c0_i32_0 = arith.constant 0 : i32
    return %arg0, %c0_i32 : i32, i32
  }
  func.func @transform_1(%arg0: i32) -> (i32, i32) {
    %c0_i32 = arith.constant 0 : i32
    %c0_i32_0 = arith.constant 0 : i32
    %c0_i32_1 = arith.constant 0 : i32
    return %c0_i32, %c0_i32_0 : i32, i32
  }
  func.func @transform_2(%arg0: i32) -> (i32, i32) {
    %c0_i32 = arith.constant 0 : i32
    %c0_i32_0 = arith.constant 0 : i32
    %c0_i32_1 = arith.constant 0 : i32
    return %c0_i32, %c0_i32_0 : i32, i32
  }
  func.func @transform_3(%arg0: i32) -> (i32, i32) {
    %c0_i32 = arith.constant 0 : i32
    %c0_i32_0 = arith.constant 0 : i32
    return %arg0, %c0_i32 : i32, i32
  }
  func.func @transform_4(%arg0: i32) -> (i32, i32) {
    %c0_i32 = arith.constant 0 : i32
    %c0_i32_0 = arith.constant 0 : i32
    return %c0_i32, %arg0 : i32, i32
  }
}

</mosaic_0001>

<llo_original>
// kernel: tpu_custom_call.1
$region0: #{tpu_custom_call.1}
  #allocation0 [shape = 'u32[]', space=smem, size = 0x4, offset = 0x4, fixed_abs, tag = 'smem constant byte address 0x4 - core index']
  #allocation1 [shape = 'u32[72,128]{1,0:T(1,128)}', space=vmem, size = 0x9000, scoped, tag = 'internal scratch']
  %s0 = inlined_call_operand.hbm [shape: f32[16,16], index: 0, kind: input, shape index: {}]
  %s1 = inlined_call_operand.hbm [shape: f32[16,128], index: 1, kind: input, shape index: {}]
  %s2 = inlined_call_operand.vmem [shape: f32[1,16], index: 2, kind: input, shape index: {}]
  %s3 = inlined_call_operand.vmem [shape: f32[16,1], index: 3, kind: output, shape index: {0}]
  %s4 = inlined_call_operand.hbm [shape: f32[1,128], index: 4, kind: output, shape index: {1}]
  %5 = xla_tuple %s3, %s4
  %s6 = sld [smem:[#allocation0]]
  $region38: #{tpu_custom_call.1} parent=0
    _
  %s8 = ssub.s32 1, %s6
  %s9 = scalar_select 0, %s8, %s6
  $region1: #{tpu_custom_call.1} parent=0
    #allocation2 [shape = 'u8[8192]{0}', space=vmem, size = 0x2000, scoped, tag = 'input window, operand 0, single buffered']
    #allocation3 [shape = 's32[1]{0}', space=sflag, size = 0x4, scoped, tag = 'scoped memory for tpu_custom_call.1']
    #allocation4 [shape = 's32[1]{0}', space=sflag, size = 0x4, scoped, tag = 'scoped memory for tpu_custom_call.1']
    #allocation5 [shape = 'u8[8192]{0}', space=vmem, size = 0x2000, scoped, tag = 'input window, operand 1, single buffered']
    #allocation6 [shape = 's32[1]{0}', space=sflag, size = 0x4, scoped, tag = 'scoped memory for tpu_custom_call.1']
    #allocation7 [shape = 'u8[512]{0}', space=vmem, size = 0x400, scoped, tag = 'output window, operand 1, single buffered']
    %10 = vsyncpa [#allocation3], 0
    %11 = vsyncpa [#allocation6], 0
    %12 = vsyncpa [#allocation4], 0
    // Predicated region
    $region2: #{tpu_custom_call.1} parent=1 // pred_check
      _
    $region3: #{tpu_custom_call.1} parent=1 // pred_check_branch
      %14 = sbr.rel (0) target = $region5
    $region4: #{tpu_custom_call.1} parent=1 // pred_region
      %16 = vsyncadd [#allocation3], 0
      %s17 = sshll.u32 %s0, 4
      %s18 = int_to_ptr.hbm [resolvable:$true] %s17
      %s19 = sshll.u32 [#allocation2], 4
      %s20 = int_to_ptr.vmem [resolvable:$true] %s19
      %25 = dma.hbm_to_vmem [thread:$0]  %s18, 256, %s20, [#allocation3], 128, 128, 8
    $region5: #{tpu_custom_call.1} parent=1 // pred_fallthru
      _
    // Predicated region
    $region6: #{tpu_custom_call.1} parent=1 // pred_check
      _
    $region7: #{tpu_custom_call.1} parent=1 // pred_check_branch
      %27 = sbr.rel (0) target = $region9
    $region8: #{tpu_custom_call.1} parent=1 // pred_region
      %29 = vsyncadd [#allocation6], 0
      %s30 = sshll.u32 %s1, 4
      %s31 = int_to_ptr.hbm [resolvable:$true] %s30
      %s32 = sshll.u32 [#allocation5], 4
      %s33 = int_to_ptr.vmem [resolvable:$true] %s32
      %38 = dma.hbm_to_vmem [thread:$0]  %s31, 256, %s33, [#allocation6], 128, 128, 8
    $region9: #{tpu_custom_call.1} parent=1 // pred_fallthru
      _
    // Predicated region
    $region10: #{tpu_custom_call.1} parent=1 // pred_check
      _
    $region11: #{tpu_custom_call.1} parent=1 // pred_check_branch
      %40 = sbr.rel (0) target = $region13
    $region12: #{tpu_custom_call.1} parent=1 // pred_region
      _
    $region13: #{tpu_custom_call.1} parent=1 // pred_fallthru
      _
    // Predicated region
    $region14: #{tpu_custom_call.1} parent=1 // pred_check
      _
    $region15: #{tpu_custom_call.1} parent=1 // pred_check_branch
      %42 = sbr.rel (0) target = $region17
    $region16: #{tpu_custom_call.1} parent=1 // pred_region
      %44 = dma.done [#allocation3], 256
    $region17: #{tpu_custom_call.1} parent=1 // pred_fallthru
      _
    // Predicated region
    $region18: #{tpu_custom_call.1} parent=1 // pred_check
      _
    $region19: #{tpu_custom_call.1} parent=1 // pred_check_branch
      %46 = sbr.rel (0) target = $region21
    $region20: #{tpu_custom_call.1} parent=1 // pred_region
      %48 = dma.done [#allocation6], 256
    $region21: #{tpu_custom_call.1} parent=1 // pred_fallthru
      _
    %v49 = vld [vmem:[#allocation2] sm:$0xff]
    %v50 = vld [vmem:[#allocation2 + $0x8] sm:$0xff]
    %v51 = vld [vmem:[#allocation5] sm:$0xff]
    %v52 = vld [vmem:[#allocation5 + $0x8] sm:$0xff]
    %vm53 = vcmask 130048
    %v55 = vsel %vm53, %v49, 0
    %v58 = vsel %vm53, %v50, 0
    %60 = vmatpush.msra.mxu0 0.0
    %61 = vmatpush.msra.mxu0 0.0
    %62 = vmatpush.msra.mxu0 0.0
    %63 = vmatpush.msra.mxu0 0.0
    %64 = vmatpush.msra.mxu0 0.0
    %65 = vmatpush.msra.mxu0 0.0
    %66 = vmatpush.msra.mxu0 0.0
    %67 = vmatpush.msra.mxu0 0.0
    %68 = vmatpush.msra.mxu0 0.0
    %69 = vmatpush.msra.mxu0 0.0
    %70 = vmatpush.msra.mxu0 0.0
    %71 = vmatpush.msra.mxu0 0.0
    %72 = vmatpush.msra.mxu0 0.0
    %73 = vmatpush.msra.mxu0 0.0
    %74 = vmatpush.msra.mxu0 %v52
    %75 = vmatpush.msra.mxu0 %v51
    %76 = vmatmul.f32.gmra.mxu0 %v55
    %v77 = vpop.f32.mrf.mxu0
    %v78 = vadd.f32 0.0, %v77
    %79 = vmatmul.f32.gmra.mxu0 %v58
    %v80 = vpop.f32.mrf.mxu0
    %v81 = vadd.f32 0.0, %v80
    %82 = vdwg.mxu0
    %vm83 = vcmask 7168
    %84 = vst.msk [vmem:[%s3] sm:$0xff] %vm83, %v78
    %85 = vst.msk [vmem:[%s3 + $0x8] sm:$0xff] %vm83, %v81
    %v86 = vmul.f32 %v78, %v78
    %v87 = vmul.f32 %v81, %v81
    %v88 = vadd.f32 %v86, %v87
    %v89 = vrot.slane %v88, 4
    %v90 = vadd.f32 %v88, %v89
    %v91 = vrot.slane %v90, 2
    %v92 = vadd.f32 %v90, %v91
    %v93 = vrot.slane %v92, 1
    %v94 = vadd.f32 %v92, %v93
    %v95 = vlaneseq
    %v96 = vand.u32 %v95, 127
    %vm97 = vcmp.eq.s32.totalorder %v96, 0
    %v98 = vsel %vm97, 0.0, %v94
    %v99 = vmul.f32 %v49, %v49
    %v100 = vmul.f32 %v50, %v50
    %v101 = vsel %vm53, %v99, 0.0
    %v102 = vsel %vm53, %v100, 0.0
    %v103 = vadd.f32 %v101, %v102
    %v104 = vrot.slane %v103, 4
    %v105 = vadd.f32 %v103, %v104
    %v106 = vrot.slane %v105, 2
    %v107 = vadd.f32 %v105, %v106
    %v108 = vrot.slane %v107, 1
    %v109 = vadd.f32 %v107, %v108
    %v110 = vld [vmem:[%s2] sm:$0x1]
    %v111 = vmul.f32 %v109, %v110
    %vm112 = vcmask 122880
    %v113 = vsel %vm112, %v111, 0.0
    %114 = vadd.xlane.f32.xlu0 %v113
    %v115 = vpop.xlane.xlu0 %114
    %v116 = vrot.slane %v115, 4
    %v117 = vadd.f32 %v115, %v116
    %v118 = vrot.slane %v117, 2
    %v119 = vadd.f32 %v117, %v118
    %v120 = vrot.slane %v119, 1
    %v121 = vadd.f32 %v119, %v120
    %s122 = vtos %v121
    %v123 = vmul.f32 %v98, 0.5
    %s124 = smul.f32 %s122, 0.00390625
    %v125 = vstv %s124
    %v126 = vsub.f32 %v123, %v125
    %127 = vst [vmem:[#allocation7] sm:$0x1] %v126
    // Predicated region
    $region22: #{tpu_custom_call.1} parent=1 // pred_check
      _
    $region23: #{tpu_custom_call.1} parent=1 // pred_check_branch
      %129 = sbr.rel (0) target = $region25
    $region24: #{tpu_custom_call.1} parent=1 // pred_region
      _
    $region25: #{tpu_custom_call.1} parent=1 // pred_fallthru
      _
    // Predicated region
    $region26: #{tpu_custom_call.1} parent=1 // pred_check
      _
    $region27: #{tpu_custom_call.1} parent=1 // pred_check_branch
      %131 = sbr.rel (0) target = $region29
    $region28: #{tpu_custom_call.1} parent=1 // pred_region
      %133 = vsyncadd [#allocation4], 0
      %s135 = sshll.u32 [#allocation7], 4
      %s136 = int_to_ptr.vmem [resolvable:$true] %s135
      %s137 = sshll.u32 %s4, 4
      %s138 = int_to_ptr.hbm [resolvable:$true] %s137
      %140 = dma.vmem_to_hbm [thread:$0]  %s136, 16, %s138, [#allocation4]
    $region29: #{tpu_custom_call.1} parent=1 // pred_fallthru
      _
    // Predicated region
    $region30: #{tpu_custom_call.1} parent=1 // pred_check
      _
    $region31: #{tpu_custom_call.1} parent=1 // pred_check_branch
      %142 = sbr.rel (0) target = $region33
    $region32: #{tpu_custom_call.1} parent=1 // pred_region
      _
    $region33: #{tpu_custom_call.1} parent=1 // pred_fallthru
      _
    // Predicated region
    $region34: #{tpu_custom_call.1} parent=1 // pred_check
      _
    $region35: #{tpu_custom_call.1} parent=1 // pred_check_branch
      %144 = sbr.rel (0) target = $region37
    $region36: #{tpu_custom_call.1} parent=1 // pred_region
      %146 = dma.done [#allocation4], 16
    $region37: #{tpu_custom_call.1} parent=1 // pred_fallthru
      _
    %147 = vsyncpa [#allocation3], 1
    %148 = vsyncpa [#allocation6], 1
    %149 = vsyncpa [#allocation4], 1

</llo_original>
